<compile_context>
chip_gen: v7x
topology: tpu7x:2x2x1
jax: 0.10.0
libtpu: 0.0.40
codegen_flags: <defaults>
</compile_context>

<pallas_src>
import jax
import jax.numpy as jnp
from jax.experimental import pallas as pl
from jax.experimental.pallas import tpu as pltpu

TEXT_HIDDEN = 1024   # roberta-large hidden size
CODE_HIDDEN = 768    # codereviewer (CodeT5) encoder hidden size
S_DIM = 32
HC_DIM = 38
MLP_IN = 2 * S_DIM + HC_DIM          # 102
MLP_HID = MLP_IN // 2                # 51
MLP_HID_PAD = 128                    # lane-dense padded hidden width
N_CLASSES = 2

# Packed f32 epilogue parameters: [PACK_ROWS, MLP_HID_PAD]
ROW_BIAS = 0    # folded MLP-1 bias: bm1 + b1 @ Wm1[:32] + b2 @ Wm1[32:64]
ROW_W2D = 1     # wm2[:, 1] - wm2[:, 0]
ROW_B2D = 2     # bm2[1] - bm2[0] stored at lane 0
PACK_ROWS = 8


def _round_up(x, m):
    return (x + m - 1) // m * m


def _head_kernel(text_ref, code_ref, hand_ref, wt_ref, wc_ref, wh_ref,
                 pack_ref, prob_ref):
    cdt = wt_ref.dtype  # bf16 compute dtype for the MXU operands

    # Single fused MLP-1 layer (fc1/fc2 folded into the weights at prep time).
    # Activations arrive in their native dtype and are cast in-VMEM (no wrapper
    # HBM pass); all matmuls accumulate in f32.
    h = jnp.dot(text_ref[...].astype(cdt), wt_ref[...],
                preferred_element_type=jnp.float32)
    h = h + jnp.dot(code_ref[...].astype(cdt), wc_ref[...],
                    preferred_element_type=jnp.float32)
    h = h + jnp.dot(hand_ref[...].astype(cdt), wh_ref[...],
                    preferred_element_type=jnp.float32)
    h = h + pack_ref[ROW_BIAS:ROW_BIAS + 1, :]
    h = jnp.maximum(h, 0.0)                                   # ReLU

    # 2-class softmax == sigmoid of the logit difference:
    #   d  = h @ (wm2[:,1] - wm2[:,0]) + (bm2[1] - bm2[0])
    #   p1 = sigmoid(d), p0 = 1 - p1
    d = jnp.sum(h * pack_ref[ROW_W2D:ROW_W2D + 1, :], axis=-1, keepdims=True)
    d = d + pack_ref[ROW_B2D:ROW_B2D + 1, 0:1]                # [tb, 1]

    e = jnp.exp(-jnp.abs(d))                                  # single EUP exp
    inv = pl.reciprocal(1.0 + e, approx=True)
    p1 = jnp.where(d >= 0.0, inv, e * inv)                    # stable sigmoid
    p0 = 1.0 - p1

    lane = jax.lax.broadcasted_iota(jnp.int32, (d.shape[0], N_CLASSES), 1)
    prob_ref[...] = jnp.where(lane == 0, p0, p1).astype(prob_ref.dtype)


def prepare_params(params, compute_dtype=jnp.bfloat16):
    """One-time parameter prep.

    Folds fc1/fc2 (weights AND biases) into the MLP-1 layer in f32, pads the
    fused projection weights to a lane-dense 128-wide bf16 layout, and packs
    the tiny f32 epilogue parameters (folded bias, wm2 difference, bm2
    difference) into one (8,128)-aligned buffer.
    """
    w1, b1, w2, b2, wm1, bm1, wm2, bm2 = [jnp.asarray(p, jnp.float32) for p in params]

    wt = w1 @ wm1[:S_DIM, :]                      # [1024, 51]
    wc = w2 @ wm1[S_DIM:2 * S_DIM, :]             # [768, 51]
    wh = wm1[2 * S_DIM:MLP_IN, :]                 # [38, 51]
    bias_folded = bm1 + b1 @ wm1[:S_DIM, :] + b2 @ wm1[S_DIM:2 * S_DIM, :]
    wm2_diff = wm2[:, 1] - wm2[:, 0]
    bm2_diff = bm2[1] - bm2[0]

    def pad_cols(w):
        return jnp.pad(w, ((0, 0), (0, MLP_HID_PAD - MLP_HID)))

    wt_p = pad_cols(wt).astype(compute_dtype)     # [1024, 128] bf16
    wc_p = pad_cols(wc).astype(compute_dtype)     # [768, 128]  bf16
    wh_p = pad_cols(wh).astype(compute_dtype)     # [38, 128]   bf16

    pack = jnp.zeros((PACK_ROWS, MLP_HID_PAD), jnp.float32)
    pack = pack.at[ROW_BIAS, :MLP_HID].set(bias_folded)
    pack = pack.at[ROW_W2D, :MLP_HID].set(wm2_diff)
    pack = pack.at[ROW_B2D, 0].set(bm2_diff)

    return (wt_p, wc_p, wh_p, pack)


def _choose_tile_b(B, desired):
    """Batch tile: large for HBM-roofline occupancy on v5e/v6e, multiple of 16,
    but capped so the grid keeps >=2 steps (both v7x TensorCores busy)."""
    if B <= 16:
        return B                                   # single full-extent block
    cap = _round_up(pl.cdiv(B, 2), 16)             # >=2 grid steps
    return max(16, min(desired, cap, _round_up(B, 16)))


def new_model_head(text_pooled, code_cls, handcrafted, prepared, *, tile_b=1024):
    """Fused head of NewModel: fc1, fc2, MLP(Linear+ReLU+Linear), softmax.

    text_pooled : [B, 1024] pooled output of the text encoder (f32 or bf16)
    code_cls    : [B, 768]  CLS-token hidden state of the code encoder
    handcrafted : [B, 38]   handcrafted features
    prepared    : output of prepare_params()
    returns     : [B, 2]    class probabilities (float32)
    """
    wt, wc, wh, pack = prepared
    B = text_pooled.shape[0]
    tb = _choose_tile_b(B, tile_b)
    grid = (pl.cdiv(B, tb),)

    grid_spec = pltpu.PrefetchScalarGridSpec(
        num_scalar_prefetch=0,
        grid=grid,
        in_specs=[
            pl.BlockSpec((tb, TEXT_HIDDEN), lambda i: (i, 0)),
            pl.BlockSpec((tb, CODE_HIDDEN), lambda i: (i, 0)),
            pl.BlockSpec((tb, HC_DIM), lambda i: (i, 0)),
            # Weights: constant block index -> fetched once, VMEM-resident.
            pl.BlockSpec((TEXT_HIDDEN, MLP_HID_PAD), lambda i: (0, 0)),
            pl.BlockSpec((CODE_HIDDEN, MLP_HID_PAD), lambda i: (0, 0)),
            pl.BlockSpec((HC_DIM, MLP_HID_PAD), lambda i: (0, 0)),
            pl.BlockSpec((PACK_ROWS, MLP_HID_PAD), lambda i: (0, 0)),
        ],
        out_specs=pl.BlockSpec((tb, N_CLASSES), lambda i: (i, 0)),
    )

    return pl.pallas_call(
        _head_kernel,
        out_shape=jax.ShapeDtypeStruct((B, N_CLASSES), jnp.float32),
        grid_spec=grid_spec,
        compiler_params=pltpu.CompilerParams(
            dimension_semantics=("parallel",),
            vmem_limit_bytes=32 * 1024 * 1024,
        ),
    )(text_pooled, code_cls, handcrafted, wt, wc, wh, pack)


def init_params(key):
    """Deterministic parameter init matching the nn.Linear shapes in __init__.
    Weights are stored transposed relative to PyTorch ([in, out]) so the math
    is plain x @ W."""
    ks = jax.random.split(key, 4)
    scale = 0.02

    def lin(k, fan_in, fan_out):
        kw, kb = jax.random.split(k)
        w = (scale * jax.random.normal(kw, (fan_in, fan_out))).astype(jnp.float32)
        b = (scale * jax.random.normal(kb, (fan_out,))).astype(jnp.float32)
        return w, b

    w1, b1 = lin(ks[0], TEXT_HIDDEN, S_DIM)      # fc1
    w2, b2 = lin(ks[1], CODE_HIDDEN, S_DIM)      # fc2
    wm1, bm1 = lin(ks[2], MLP_IN, MLP_HID)       # mlp[0]
    wm2, bm2 = lin(ks[3], MLP_HID, N_CLASSES)    # mlp[2]
    return (w1, b1, w2, b2, wm1, bm1, wm2, bm2)


def _reference_head(text_pooled, code_cls, handcrafted, params):
    """Pure-JAX f32 reference (same fc2-applied semantics)."""
    w1, b1, w2, b2, wm1, bm1, wm2, bm2 = params
    t = text_pooled @ w1 + b1
    c = code_cls @ w2 + b2
    x = jnp.concatenate([t, c, handcrafted], axis=-1)
    h = jnp.maximum(x @ wm1 + bm1, 0.0)
    logits = h @ wm2 + bm2
    return jax.nn.softmax(logits, axis=-1)


if __name__ == "__main__":
    key = jax.random.PRNGKey(0)
    k_text, k_code, k_hand, k_params = jax.random.split(key, 4)

    B = 8
    # Surrogates for the encoder outputs (pretrained transformers not reproduced).
    text_pooled = jax.random.normal(k_text, (B, TEXT_HIDDEN), dtype=jnp.float32)
    code_cls = jax.random.normal(k_code, (B, CODE_HIDDEN), dtype=jnp.float32)
    handcrafted = jax.random.normal(k_hand, (B, HC_DIM), dtype=jnp.float32)

    params = init_params(k_params)
    prepared = prepare_params(params)

    prob = new_model_head(text_pooled, code_cls, handcrafted, prepared)
    prob = jax.block_until_ready(prob)

    assert prob.shape == (B, N_CLASSES)
    # rows of a softmax must sum to 1 (p0 = 1 - p1 by construction)
    assert bool(jnp.all(jnp.abs(jnp.sum(prob, axis=-1) - 1.0) < 1e-5))
    # agreement with the f32 pure-JAX reference (bf16 fused weights -> loose tol)
    ref = _reference_head(text_pooled, code_cls, handcrafted, params)
    assert bool(jnp.max(jnp.abs(prob - ref)) < 1e-2)

    print("KERNEL_OK")
</pallas_src>

<mosaic_0001>
module attributes {stable_mosaic.version = 11 : i64} {
  func.func @_head_kernel(%arg0: i32, %arg1: memref<8x1024xf32, #tpu.memory_space<vmem>>, %arg2: memref<8x768xf32, #tpu.memory_space<vmem>>, %arg3: memref<8x38xf32, #tpu.memory_space<vmem>>, %arg4: memref<1024x128xbf16, #tpu.memory_space<vmem>>, %arg5: memref<768x128xbf16, #tpu.memory_space<vmem>>, %arg6: memref<38x128xbf16, #tpu.memory_space<vmem>>, %arg7: memref<8x128xf32, #tpu.memory_space<vmem>>, %arg8: memref<8x2xf32, #tpu.memory_space<vmem>>) attributes {dimension_semantics = [#tpu.dimension_semantics<parallel>], iteration_bounds = array<i64: 1>, scalar_prefetch = 0 : i64, scratch_operands = 0 : i64, tpu.core_type = #tpu.core_type<tc>, window_params = [{transform_indices = @transform_0, window_bounds = array<i64: 8, 1024>}, {transform_indices = @transform_1, window_bounds = array<i64: 8, 768>}, {transform_indices = @transform_2, window_bounds = array<i64: 8, 38>}, {pipeline_mode = #tpu.pipeline_mode<synchronous>, transform_indices = @transform_3, window_bounds = array<i64: 1024, 128>}, {pipeline_mode = #tpu.pipeline_mode<synchronous>, transform_indices = @transform_4, window_bounds = array<i64: 768, 128>}, {pipeline_mode = #tpu.pipeline_mode<synchronous>, transform_indices = @transform_5, window_bounds = array<i64: 38, 128>}, {pipeline_mode = #tpu.pipeline_mode<synchronous>, transform_indices = @transform_6, window_bounds = array<i64: 8, 128>}, {transform_indices = @transform_7, window_bounds = array<i64: 8, 2>}]} {
    %c0 = arith.constant 0 : index
    %c0_0 = arith.constant 0 : index
    %0 = vector.load %arg1[%c0, %c0_0] : memref<8x1024xf32, #tpu.memory_space<vmem>>, vector<8x1024xf32>
    %1 = arith.truncf %0 : vector<8x1024xf32> to vector<8x1024xbf16>
    %c0_1 = arith.constant 0 : index
    %c0_2 = arith.constant 0 : index
    %2 = vector.load %arg4[%c0_1, %c0_2] : memref<1024x128xbf16, #tpu.memory_space<vmem>>, vector<1024x128xbf16>
    %cst = arith.constant dense<0.000000e+00> : vector<8x128xf32>
    %3 = tpu.matmul %1, %2, %cst {dimension_numbers = #tpu.dot_dimension_numbers<[1], [0], [0], [1], [0, 0, 1, 1], [], []>} : vector<8x1024xbf16>, vector<1024x128xbf16>, vector<8x128xf32> -> vector<8x128xf32>
    %c0_3 = arith.constant 0 : index
    %c0_4 = arith.constant 0 : index
    %4 = vector.load %arg2[%c0_3, %c0_4] : memref<8x768xf32, #tpu.memory_space<vmem>>, vector<8x768xf32>
    %5 = arith.truncf %4 : vector<8x768xf32> to vector<8x768xbf16>
    %c0_5 = arith.constant 0 : index
    %c0_6 = arith.constant 0 : index
    %6 = vector.load %arg5[%c0_5, %c0_6] : memref<768x128xbf16, #tpu.memory_space<vmem>>, vector<768x128xbf16>
    %cst_7 = arith.constant dense<0.000000e+00> : vector<8x128xf32>
    %7 = tpu.matmul %5, %6, %cst_7 {dimension_numbers = #tpu.dot_dimension_numbers<[1], [0], [0], [1], [0, 0, 1, 1], [], []>} : vector<8x768xbf16>, vector<768x128xbf16>, vector<8x128xf32> -> vector<8x128xf32>
    %8 = arith.addf %3, %7 : vector<8x128xf32>
    %c0_8 = arith.constant 0 : index
    %c0_9 = arith.constant 0 : index
    %9 = vector.load %arg3[%c0_8, %c0_9] : memref<8x38xf32, #tpu.memory_space<vmem>>, vector<8x38xf32>
    %10 = arith.truncf %9 : vector<8x38xf32> to vector<8x38xbf16>
    %c0_10 = arith.constant 0 : index
    %c0_11 = arith.constant 0 : index
    %11 = vector.load %arg6[%c0_10, %c0_11] : memref<38x128xbf16, #tpu.memory_space<vmem>>, vector<38x128xbf16>
    %cst_12 = arith.constant dense<0.000000e+00> : vector<8x128xf32>
    %12 = tpu.matmul %10, %11, %cst_12 {dimension_numbers = #tpu.dot_dimension_numbers<[1], [0], [0], [1], [0, 0, 1, 1], [], []>} : vector<8x38xbf16>, vector<38x128xbf16>, vector<8x128xf32> -> vector<8x128xf32>
    %13 = arith.addf %8, %12 : vector<8x128xf32>
    %c0_13 = arith.constant 0 : index
    %c0_14 = arith.constant 0 : index
    %14 = vector.load %arg7[%c0_13, %c0_14] : memref<8x128xf32, #tpu.memory_space<vmem>>, vector<1x128xf32>
    %15 = vector.broadcast %14 : vector<1x128xf32> to vector<8x128xf32>
    %16 = arith.addf %13, %15 : vector<8x128xf32>
    %cst_15 = arith.constant 0.000000e+00 : f32
    %17 = vector.broadcast %cst_15 : f32 to vector<8x128xf32>
    %18 = arith.maximumf %16, %17 : vector<8x128xf32>
    %c1 = arith.constant 1 : index
    %c0_16 = arith.constant 0 : index
    %19 = vector.load %arg7[%c1, %c0_16] : memref<8x128xf32, #tpu.memory_space<vmem>>, vector<1x128xf32>
    %20 = vector.broadcast %19 : vector<1x128xf32> to vector<8x128xf32>
    %21 = arith.mulf %18, %20 : vector<8x128xf32>
    %cst_17 = arith.constant dense<0.000000e+00> : vector<8xf32>
    %22 = vector.multi_reduction <add>, %21, %cst_17 [1] : vector<8x128xf32> to vector<8xf32>
    %23 = vector.shape_cast %22 : vector<8xf32> to vector<8x1xf32>
    %c2 = arith.constant 2 : index
    %c0_18 = arith.constant 0 : index
    %24 = vector.load %arg7[%c2, %c0_18] : memref<8x128xf32, #tpu.memory_space<vmem>>, vector<1x1xf32>
    %25 = vector.broadcast %24 : vector<1x1xf32> to vector<8x1xf32>
    %26 = arith.addf %23, %25 : vector<8x1xf32>
    %27 = math.absf %26 : vector<8x1xf32>
    %cst_19 = arith.constant 0.000000e+00 : f32
    %28 = vector.broadcast %cst_19 : f32 to vector<8x1xf32>
    %29 = arith.subf %28, %27 : vector<8x1xf32>
    %30 = math.exp %29 : vector<8x1xf32>
    %cst_20 = arith.constant 1.000000e+00 : f32
    %31 = vector.broadcast %cst_20 : f32 to vector<8x1xf32>
    %32 = arith.addf %31, %30 : vector<8x1xf32>
    %33 = tpu.reciprocal %32 {approx = true} : vector<8x1xf32> -> vector<8x1xf32>
    %cst_21 = arith.constant 0.000000e+00 : f32
    %34 = vector.broadcast %cst_21 : f32 to vector<8x1xf32>
    %35 = arith.cmpf oge, %26, %34 : vector<8x1xf32>
    %36 = arith.mulf %30, %33 : vector<8x1xf32>
    %37 = arith.select %35, %33, %36 : vector<8x1xi1>, vector<8x1xf32>
    %cst_22 = arith.constant 1.000000e+00 : f32
    %38 = vector.broadcast %cst_22 : f32 to vector<8x1xf32>
    %39 = arith.subf %38, %37 : vector<8x1xf32>
    %40 = tpu.iota {dimensions = array<i32: 1>} : vector<8x2xi32>
    %c0_i32 = arith.constant 0 : i32
    %41 = vector.broadcast %c0_i32 : i32 to vector<8x2xi32>
    %42 = arith.cmpi eq, %40, %41 : vector<8x2xi32>
    %43 = vector.shape_cast %39 : vector<8x1xf32> to vector<8x1xf32>
    %44 = vector.broadcast %43 : vector<8x1xf32> to vector<8x2xf32>
    %45 = vector.shape_cast %37 : vector<8x1xf32> to vector<8x1xf32>
    %46 = vector.broadcast %45 : vector<8x1xf32> to vector<8x2xf32>
    %47 = arith.select %42, %44, %46 : vector<8x2xi1>, vector<8x2xf32>
    %c0_23 = arith.constant 0 : index
    %c0_24 = arith.constant 0 : index
    %48 = vector.load %arg8[%c0_23, %c0_24] : memref<8x2xf32, #tpu.memory_space<vmem>>, vector<8x2xf32>
    tpu.vector_store %arg8[%c0_23, %c0_24], %47 {strides = array<i32>} : memref<8x2xf32, #tpu.memory_space<vmem>>, vector<8x2xf32>,
    return
  }
  func.func @transform_0(%arg0: i32) -> (i32, i32) {
    %c0_i32 = arith.constant 0 : i32
    %c0_i32_0 = arith.constant 0 : i32
    return %arg0, %c0_i32 : i32, i32
  }
  func.func @transform_1(%arg0: i32) -> (i32, i32) {
    %c0_i32 = arith.constant 0 : i32
    %c0_i32_0 = arith.constant 0 : i32
    return %arg0, %c0_i32 : i32, i32
  }
  func.func @transform_2(%arg0: i32) -> (i32, i32) {
    %c0_i32 = arith.constant 0 : i32
    %c0_i32_0 = arith.constant 0 : i32
    return %arg0, %c0_i32 : i32, i32
  }
  func.func @transform_3(%arg0: i32) -> (i32, i32) {
    %c0_i32 = arith.constant 0 : i32
    %c0_i32_0 = arith.constant 0 : i32
    %c0_i32_1 = arith.constant 0 : i32
    return %c0_i32, %c0_i32_0 : i32, i32
  }
  func.func @transform_4(%arg0: i32) -> (i32, i32) {
    %c0_i32 = arith.constant 0 : i32
    %c0_i32_0 = arith.constant 0 : i32
    %c0_i32_1 = arith.constant 0 : i32
    return %c0_i32, %c0_i32_0 : i32, i32
  }
  func.func @transform_5(%arg0: i32) -> (i32, i32) {
    %c0_i32 = arith.constant 0 : i32
    %c0_i32_0 = arith.constant 0 : i32
    %c0_i32_1 = arith.constant 0 : i32
    return %c0_i32, %c0_i32_0 : i32, i32
  }
  func.func @transform_6(%arg0: i32) -> (i32, i32) {
    %c0_i32 = arith.constant 0 : i32
    %c0_i32_0 = arith.constant 0 : i32
    %c0_i32_1 = arith.constant 0 : i32
    return %c0_i32, %c0_i32_0 : i32, i32
  }
  func.func @transform_7(%arg0: i32) -> (i32, i32) {
    %c0_i32 = arith.constant 0 : i32
    %c0_i32_0 = arith.constant 0 : i32
    return %arg0, %c0_i32 : i32, i32
  }
}

</mosaic_0001>

<llo_original>
// kernel: tpu_custom_call.1
$region0: #{tpu_custom_call.1}
  #allocation0 [shape = 'u32[]', space=smem, size = 0x4, offset = 0x4, fixed_abs, tag = 'smem constant byte address 0x4 - core index']
  #allocation1 [shape = 'u32[144,128]{1,0:T(1,128)}', space=vmem, size = 0x12000, scoped, tag = 'internal scratch']
  %s0 = inlined_call_operand.hbm [shape: f32[8,1024], index: 0, kind: input, shape index: {}]
  %s1 = inlined_call_operand.hbm [shape: f32[8,768], index: 1, kind: input, shape index: {}]
  %s2 = inlined_call_operand.hbm [shape: f32[8,38], index: 2, kind: input, shape index: {}]
  %s3 = inlined_call_operand.hbm [shape: bf16[1024,128], index: 3, kind: input, shape index: {}]
  %s4 = inlined_call_operand.hbm [shape: bf16[768,128], index: 4, kind: input, shape index: {}]
  %s5 = inlined_call_operand.hbm [shape: bf16[38,128], index: 5, kind: input, shape index: {}]
  %s6 = inlined_call_operand.vmem [shape: f32[8,128], index: 6, kind: input, shape index: {}]
  %s7 = inlined_call_operand.vmem [shape: f32[8,2], index: 7, kind: output, shape index: {}]
  %s8 = sld [smem:[#allocation0]]
  $region62: #{tpu_custom_call.1} parent=0
    _
  %s10 = ssub.s32 1, %s8
  %s11 = scalar_select 0, %s10, %s8
  $region1: #{tpu_custom_call.1} parent=0
    #allocation2 [shape = 'u8[32768]{0}', space=vmem, size = 0x8000, scoped, tag = 'input window, operand 0, single buffered']
    #allocation3 [shape = 's32[1]{0}', space=sflag, size = 0x4, scoped, tag = 'scoped memory for tpu_custom_call.1']
    #allocation4 [shape = 'u8[24576]{0}', space=vmem, size = 0x6000, scoped, tag = 'input window, operand 1, single buffered']
    #allocation5 [shape = 's32[1]{0}', space=sflag, size = 0x4, scoped, tag = 'scoped memory for tpu_custom_call.1']
    #allocation6 [shape = 'u8[4096]{0}', space=vmem, size = 0x1000, scoped, tag = 'input window, operand 2, single buffered']
    #allocation7 [shape = 'u8[262144]{0}', space=vmem, size = 0x40000, scoped, tag = 'input window, operand 3, single buffered']
    #allocation8 [shape = 's32[1]{0}', space=sflag, size = 0x4, scoped, tag = 'scoped memory for tpu_custom_call.1']
    #allocation9 [shape = 'u8[196608]{0}', space=vmem, size = 0x30000, scoped, tag = 'input window, operand 4, single buffered']
    #allocation10 [shape = 'u8[10240]{0}', space=vmem, size = 0x2800, scoped, tag = 'input window, operand 5, single buffered']
    #allocation11 [shape = 's32[1]{0}', space=sflag, size = 0x4, scoped, tag = 'scoped memory for tpu_custom_call.1']
    %12 = vsyncpa [#allocation3], 0
    %13 = vsyncpa [#allocation5], 0
    %14 = vsyncpa [#allocation8], 0
    %15 = vsyncpa [#allocation11], 0
    // Predicated region
    $region2: #{tpu_custom_call.1} parent=1 // pred_check
      _
    $region3: #{tpu_custom_call.1} parent=1 // pred_check_branch
      %17 = sbr.rel (0) target = $region5
    $region4: #{tpu_custom_call.1} parent=1 // pred_region
      %s19 = ssub.s32 1024, 1024
      %20 = vsyncadd [#allocation3], %s19
      %s22 = sshll.u32 [#allocation2], 4
      %s23 = int_to_ptr.vmem [resolvable:$true] %s22
      %25 = dma.hbm_to_vmem [thread:$0]  %s0, 1024, %s23, [#allocation3]
    $region5: #{tpu_custom_call.1} parent=1 // pred_fallthru
      _
    // Predicated region
    $region6: #{tpu_custom_call.1} parent=1 // pred_check
      _
    $region7: #{tpu_custom_call.1} parent=1 // pred_check_branch
      %27 = sbr.rel (0) target = $region9
    $region8: #{tpu_custom_call.1} parent=1 // pred_region
      %s29 = ssub.s32 768, 768
      %30 = vsyncadd [#allocation5], %s29
      %s32 = sshll.u32 [#allocation4], 4
      %s33 = int_to_ptr.vmem [resolvable:$true] %s32
      %35 = dma.hbm_to_vmem [thread:$0]  %s1, 768, %s33, [#allocation5]
    $region9: #{tpu_custom_call.1} parent=1 // pred_fallthru
      _
    // Predicated region
    $region10: #{tpu_custom_call.1} parent=1 // pred_check
      _
    $region11: #{tpu_custom_call.1} parent=1 // pred_check_branch
      %37 = sbr.rel (0) target = $region13
    $region12: #{tpu_custom_call.1} parent=1 // pred_region
      %s39 = ssub.s32 128, 128
      %40 = vsyncadd [#allocation5], %s39
      %s42 = sshll.u32 [#allocation6], 4
      %s43 = int_to_ptr.vmem [resolvable:$true] %s42
      %45 = dma.hbm_to_vmem [thread:$0]  %s2, 128, %s43, [#allocation5]
    $region13: #{tpu_custom_call.1} parent=1 // pred_fallthru
      _
    // Predicated region
    $region14: #{tpu_custom_call.1} parent=1 // pred_check
      _
    $region15: #{tpu_custom_call.1} parent=1 // pred_check_branch
      %47 = sbr.rel (0) target = $region17
    $region16: #{tpu_custom_call.1} parent=1 // pred_region
      %s49 = ssub.s32 8192, 8192
      %50 = vsyncadd [#allocation8], %s49
      %s51 = sshll.u32 [#allocation7], 4
      %s52 = int_to_ptr.vmem [resolvable:$true] %s51
      %57 = dma.hbm_to_vmem [thread:$0]  %s3, 8192, %s52, [#allocation8], 64, 64, 4
    $region17: #{tpu_custom_call.1} parent=1 // pred_fallthru
      _
    // Predicated region
    $region18: #{tpu_custom_call.1} parent=1 // pred_check
      _
    $region19: #{tpu_custom_call.1} parent=1 // pred_check_branch
      %59 = sbr.rel (0) target = $region21
    $region20: #{tpu_custom_call.1} parent=1 // pred_region
      %s61 = ssub.s32 6144, 6144
      %62 = vsyncadd [#allocation8], %s61
      %s63 = sshll.u32 [#allocation9], 4
      %s64 = int_to_ptr.vmem [resolvable:$true] %s63
      %69 = dma.hbm_to_vmem [thread:$0]  %s4, 6144, %s64, [#allocation8], 64, 64, 4
    $region21: #{tpu_custom_call.1} parent=1 // pred_fallthru
      _
    // Predicated region
    $region22: #{tpu_custom_call.1} parent=1 // pred_check
      _
    $region23: #{tpu_custom_call.1} parent=1 // pred_check_branch
      %71 = sbr.rel (0) target = $region25
    $region24: #{tpu_custom_call.1} parent=1 // pred_region
      %s73 = ssub.s32 320, 320
      %74 = vsyncadd [#allocation11], %s73
      %s75 = sshll.u32 [#allocation10], 4
      %s76 = int_to_ptr.vmem [resolvable:$true] %s75
      %81 = dma.hbm_to_vmem [thread:$0]  %s5, 320, %s76, [#allocation11], 64, 64, 4
    $region25: #{tpu_custom_call.1} parent=1 // pred_fallthru
      _
    // Predicated region
    $region26: #{tpu_custom_call.1} parent=1 // pred_check
      _
    $region27: #{tpu_custom_call.1} parent=1 // pred_check_branch
      %83 = sbr.rel (0) target = $region29
    $region28: #{tpu_custom_call.1} parent=1 // pred_region
      _
    $region29: #{tpu_custom_call.1} parent=1 // pred_fallthru
      _
    // Predicated region
    $region30: #{tpu_custom_call.1} parent=1 // pred_check
      _
    $region31: #{tpu_custom_call.1} parent=1 // pred_check_branch
      %85 = sbr.rel (0) target = $region33
    $region32: #{tpu_custom_call.1} parent=1 // pred_region
      %86 = dma.done [#allocation3], 1024
    $region33: #{tpu_custom_call.1} parent=1 // pred_fallthru
      _
    // Predicated region
    $region34: #{tpu_custom_call.1} parent=1 // pred_check
      _
    $region35: #{tpu_custom_call.1} parent=1 // pred_check_branch
      %88 = sbr.rel (0) target = $region37
    $region36: #{tpu_custom_call.1} parent=1 // pred_region
      %89 = dma.done [#allocation5], 768
    $region37: #{tpu_custom_call.1} parent=1 // pred_fallthru
      _
    // Predicated region
    $region38: #{tpu_custom_call.1} parent=1 // pred_check
      _
    $region39: #{tpu_custom_call.1} parent=1 // pred_check_branch
      %91 = sbr.rel (0) target = $region41
    $region40: #{tpu_custom_call.1} parent=1 // pred_region
      %92 = dma.done [#allocation5], 128
    $region41: #{tpu_custom_call.1} parent=1 // pred_fallthru
      _
    // Predicated region
    $region42: #{tpu_custom_call.1} parent=1 // pred_check
      _
    $region43: #{tpu_custom_call.1} parent=1 // pred_check_branch
      %94 = sbr.rel (0) target = $region45
    $region44: #{tpu_custom_call.1} parent=1 // pred_region
      %95 = dma.done [#allocation8], 8192
    $region45: #{tpu_custom_call.1} parent=1 // pred_fallthru
      _
    // Predicated region
    $region46: #{tpu_custom_call.1} parent=1 // pred_check
      _
    $region47: #{tpu_custom_call.1} parent=1 // pred_check_branch
      %97 = sbr.rel (0) target = $region49
    $region48: #{tpu_custom_call.1} parent=1 // pred_region
      %98 = dma.done [#allocation8], 6144
    $region49: #{tpu_custom_call.1} parent=1 // pred_fallthru
      _
    // Predicated region
    $region50: #{tpu_custom_call.1} parent=1 // pred_check
      _
    $region51: #{tpu_custom_call.1} parent=1 // pred_check_branch
      %100 = sbr.rel (0) target = $region53
    $region52: #{tpu_custom_call.1} parent=1 // pred_region
      %101 = dma.done [#allocation11], 320
    $region53: #{tpu_custom_call.1} parent=1 // pred_fallthru
      _
    %v103 = vld [vmem:[#allocation2] sm:$0xff]
    %v104 = vld [vmem:[#allocation2 + $0x8] sm:$0xff]
    %v105 = vld [vmem:[#allocation2 + $0x10] sm:$0xff]
    %v106 = vld [vmem:[#allocation2 + $0x18] sm:$0xff]
    %v107 = vld [vmem:[#allocation2 + $0x20] sm:$0xff]
    %v108 = vld [vmem:[#allocation2 + $0x28] sm:$0xff]
    %v109 = vld [vmem:[#allocation2 + $0x30] sm:$0xff]
    %v110 = vld [vmem:[#allocation2 + $0x38] sm:$0xff]
    %v111 = vpack.c.bf16 %v103, %v103
    %v112 = vpack.c.bf16 %v104, %v104
    %v113 = vpack.c.bf16 %v105, %v105
    %v114 = vpack.c.bf16 %v106, %v106
    %v115 = vpack.c.bf16 %v107, %v107
    %v116 = vpack.c.bf16 %v108, %v108
    %v117 = vpack.c.bf16 %v109, %v109
    %v118 = vpack.c.bf16 %v110, %v110
    %v119 = vld [vmem:[#allocation7] sm:$0xf]
    %v120 = vld [vmem:[#allocation7 + $0x4] sm:$0xf]
    %v121 = vld [vmem:[#allocation7 + $0x8] sm:$0xf]
    %v122 = vld [vmem:[#allocation7 + $0xc] sm:$0xf]
    %v123 = vld [vmem:[#allocation7 + $0x10] sm:$0xf]
    %v124 = vld [vmem:[#allocation7 + $0x14] sm:$0xf]
    %v125 = vld [vmem:[#allocation7 + $0x18] sm:$0xf]
    %v126 = vld [vmem:[#allocation7 + $0x1c] sm:$0xf]
    %v127 = vld [vmem:[#allocation7 + $0x20] sm:$0xf]
    %v128 = vld [vmem:[#allocation7 + $0x24] sm:$0xf]
    %v129 = vld [vmem:[#allocation7 + $0x28] sm:$0xf]
    %v130 = vld [vmem:[#allocation7 + $0x2c] sm:$0xf]
    %v131 = vld [vmem:[#allocation7 + $0x30] sm:$0xf]
    %v132 = vld [vmem:[#allocation7 + $0x34] sm:$0xf]
    %v133 = vld [vmem:[#allocation7 + $0x38] sm:$0xf]
    %v134 = vld [vmem:[#allocation7 + $0x3c] sm:$0xf]
    %v135 = vld [vmem:[#allocation7 + $0x40] sm:$0xf]
    %v136 = vld [vmem:[#allocation7 + $0x44] sm:$0xf]
    %v137 = vld [vmem:[#allocation7 + $0x48] sm:$0xf]
    %v138 = vld [vmem:[#allocation7 + $0x4c] sm:$0xf]
    %v139 = vld [vmem:[#allocation7 + $0x50] sm:$0xf]
    %v140 = vld [vmem:[#allocation7 + $0x54] sm:$0xf]
    %v141 = vld [vmem:[#allocation7 + $0x58] sm:$0xf]
    %v142 = vld [vmem:[#allocation7 + $0x5c] sm:$0xf]
    %v143 = vld [vmem:[#allocation7 + $0x60] sm:$0xf]
    %v144 = vld [vmem:[#allocation7 + $0x64] sm:$0xf]
    %v145 = vld [vmem:[#allocation7 + $0x68] sm:$0xf]
    %v146 = vld [vmem:[#allocation7 + $0x6c] sm:$0xf]
    %v147 = vld [vmem:[#allocation7 + $0x70] sm:$0xf]
    %v148 = vld [vmem:[#allocation7 + $0x74] sm:$0xf]
    %v149 = vld [vmem:[#allocation7 + $0x78] sm:$0xf]
    %v150 = vld [vmem:[#allocation7 + $0x7c] sm:$0xf]
    %v151 = vld [vmem:[#allocation7 + $0x80] sm:$0xf]
    %v152 = vld [vmem:[#allocation7 + $0x84] sm:$0xf]
    %v153 = vld [vmem:[#allocation7 + $0x88] sm:$0xf]
    %v154 = vld [vmem:[#allocation7 + $0x8c] sm:$0xf]
    %v155 = vld [vmem:[#allocation7 + $0x90] sm:$0xf]
    %v156 = vld [vmem:[#allocation7 + $0x94] sm:$0xf]
    %v157 = vld [vmem:[#allocation7 + $0x98] sm:$0xf]
    %v158 = vld [vmem:[#allocation7 + $0x9c] sm:$0xf]
    %v159 = vld [vmem:[#allocation7 + $0xa0] sm:$0xf]
    %v160 = vld [vmem:[#allocation7 + $0xa4] sm:$0xf]
    %v161 = vld [vmem:[#allocation7 + $0xa8] sm:$0xf]
    %v162 = vld [vmem:[#allocation7 + $0xac] sm:$0xf]
    %v163 = vld [vmem:[#allocation7 + $0xb0] sm:$0xf]
    %v164 = vld [vmem:[#allocation7 + $0xb4] sm:$0xf]
    %v165 = vld [vmem:[#allocation7 + $0xb8] sm:$0xf]
    %v166 = vld [vmem:[#allocation7 + $0xbc] sm:$0xf]
    %v167 = vld [vmem:[#allocation7 + $0xc0] sm:$0xf]
    %v168 = vld [vmem:[#allocation7 + $0xc4] sm:$0xf]
    %v169 = vld [vmem:[#allocation7 + $0xc8] sm:$0xf]
    %v170 = vld [vmem:[#allocation7 + $0xcc] sm:$0xf]
    %v171 = vld [vmem:[#allocation7 + $0xd0] sm:$0xf]
    %v172 = vld [vmem:[#allocation7 + $0xd4] sm:$0xf]
    %v173 = vld [vmem:[#allocation7 + $0xd8] sm:$0xf]
    %v174 = vld [vmem:[#allocation7 + $0xdc] sm:$0xf]
    %v175 = vld [vmem:[#allocation7 + $0xe0] sm:$0xf]
    %v176 = vld [vmem:[#allocation7 + $0xe4] sm:$0xf]
    %v177 = vld [vmem:[#allocation7 + $0xe8] sm:$0xf]
    %v178 = vld [vmem:[#allocation7 + $0xec] sm:$0xf]
    %v179 = vld [vmem:[#allocation7 + $0xf0] sm:$0xf]
    %v180 = vld [vmem:[#allocation7 + $0xf4] sm:$0xf]
    %v181 = vld [vmem:[#allocation7 + $0xf8] sm:$0xf]
    %v182 = vld [vmem:[#allocation7 + $0xfc] sm:$0xf]
    %v183 = vld [vmem:[#allocation7 + $0x100] sm:$0xf]
    %v184 = vld [vmem:[#allocation7 + $0x104] sm:$0xf]
    %v185 = vld [vmem:[#allocation7 + $0x108] sm:$0xf]
    %v186 = vld [vmem:[#allocation7 + $0x10c] sm:$0xf]
    %v187 = vld [vmem:[#allocation7 + $0x110] sm:$0xf]
    %v188 = vld [vmem:[#allocation7 + $0x114] sm:$0xf]
    %v189 = vld [vmem:[#allocation7 + $0x118] sm:$0xf]
    %v190 = vld [vmem:[#allocation7 + $0x11c] sm:$0xf]
    %v191 = vld [vmem:[#allocation7 + $0x120] sm:$0xf]
    %v192 = vld [vmem:[#allocation7 + $0x124] sm:$0xf]
    %v193 = vld [vmem:[#allocation7 + $0x128] sm:$0xf]
    %v194 = vld [vmem:[#allocation7 + $0x12c] sm:$0xf]
    %v195 = vld [vmem:[#allocation7 + $0x130] sm:$0xf]
    %v196 = vld [vmem:[#allocation7 + $0x134] sm:$0xf]
    %v197 = vld [vmem:[#allocation7 + $0x138] sm:$0xf]
    %v198 = vld [vmem:[#allocation7 + $0x13c] sm:$0xf]
    %v199 = vld [vmem:[#allocation7 + $0x140] sm:$0xf]
    %v200 = vld [vmem:[#allocation7 + $0x144] sm:$0xf]
    %v201 = vld [vmem:[#allocation7 + $0x148] sm:$0xf]
    %v202 = vld [vmem:[#allocation7 + $0x14c] sm:$0xf]
    %v203 = vld [vmem:[#allocation7 + $0x150] sm:$0xf]
    %v204 = vld [vmem:[#allocation7 + $0x154] sm:$0xf]
    %v205 = vld [vmem:[#allocation7 + $0x158] sm:$0xf]
    %v206 = vld [vmem:[#allocation7 + $0x15c] sm:$0xf]
    %v207 = vld [vmem:[#allocation7 + $0x160] sm:$0xf]
    %v208 = vld [vmem:[#allocation7 + $0x164] sm:$0xf]
    %v209 = vld [vmem:[#allocation7 + $0x168] sm:$0xf]
    %v210 = vld [vmem:[#allocation7 + $0x16c] sm:$0xf]
    %v211 = vld [vmem:[#allocation7 + $0x170] sm:$0xf]
    %v212 = vld [vmem:[#allocation7 + $0x174] sm:$0xf]
    %v213 = vld [vmem:[#allocation7 + $0x178] sm:$0xf]
    %v214 = vld [vmem:[#allocation7 + $0x17c] sm:$0xf]
    %v215 = vld [vmem:[#allocation7 + $0x180] sm:$0xf]
    %v216 = vld [vmem:[#allocation7 + $0x184] sm:$0xf]
    %v217 = vld [vmem:[#allocation7 + $0x188] sm:$0xf]
    %v218 = vld [vmem:[#allocation7 + $0x18c] sm:$0xf]
    %v219 = vld [vmem:[#allocation7 + $0x190] sm:$0xf]
    %v220 = vld [vmem:[#allocation7 + $0x194] sm:$0xf]
    %v221 = vld [vmem:[#allocation7 + $0x198] sm:$0xf]
    %v222 = vld [vmem:[#allocation7 + $0x19c] sm:$0xf]
    %v223 = vld [vmem:[#allocation7 + $0x1a0] sm:$0xf]
    %v224 = vld [vmem:[#allocation7 + $0x1a4] sm:$0xf]
    %v225 = vld [vmem:[#allocation7 + $0x1a8] sm:$0xf]
    %v226 = vld [vmem:[#allocation7 + $0x1ac] sm:$0xf]
    %v227 = vld [vmem:[#allocation7 + $0x1b0] sm:$0xf]
    %v228 = vld [vmem:[#allocation7 + $0x1b4] sm:$0xf]
    %v229 = vld [vmem:[#allocation7 + $0x1b8] sm:$0xf]
    %v230 = vld [vmem:[#allocation7 + $0x1bc] sm:$0xf]
    %v231 = vld [vmem:[#allocation7 + $0x1c0] sm:$0xf]
    %v232 = vld [vmem:[#allocation7 + $0x1c4] sm:$0xf]
    %v233 = vld [vmem:[#allocation7 + $0x1c8] sm:$0xf]
    %v234 = vld [vmem:[#allocation7 + $0x1cc] sm:$0xf]
    %v235 = vld [vmem:[#allocation7 + $0x1d0] sm:$0xf]
    %v236 = vld [vmem:[#allocation7 + $0x1d4] sm:$0xf]
    %v237 = vld [vmem:[#allocation7 + $0x1d8] sm:$0xf]
    %v238 = vld [vmem:[#allocation7 + $0x1dc] sm:$0xf]
    %v239 = vld [vmem:[#allocation7 + $0x1e0] sm:$0xf]
    %v240 = vld [vmem:[#allocation7 + $0x1e4] sm:$0xf]
    %v241 = vld [vmem:[#allocation7 + $0x1e8] sm:$0xf]
    %v242 = vld [vmem:[#allocation7 + $0x1ec] sm:$0xf]
    %v243 = vld [vmem:[#allocation7 + $0x1f0] sm:$0xf]
    %v244 = vld [vmem:[#allocation7 + $0x1f4] sm:$0xf]
    %v245 = vld [vmem:[#allocation7 + $0x1f8] sm:$0xf]
    %v246 = vld [vmem:[#allocation7 + $0x1fc] sm:$0xf]
    %v247 = vld [vmem:[#allocation4] sm:$0xff]
    %v248 = vld [vmem:[#allocation4 + $0x8] sm:$0xff]
    %v249 = vld [vmem:[#allocation4 + $0x10] sm:$0xff]
    %v250 = vld [vmem:[#allocation4 + $0x18] sm:$0xff]
    %v251 = vld [vmem:[#allocation4 + $0x20] sm:$0xff]
    %v252 = vld [vmem:[#allocation4 + $0x28] sm:$0xff]
    %v253 = vpack.c.bf16 %v247, %v247
    %v254 = vpack.c.bf16 %v248, %v248
    %v255 = vpack.c.bf16 %v249, %v249
    %v256 = vpack.c.bf16 %v250, %v250
    %v257 = vpack.c.bf16 %v251, %v251
    %v258 = vpack.c.bf16 %v252, %v252
    %v259 = vld [vmem:[#allocation9] sm:$0xf]
    %v260 = vld [vmem:[#allocation9 + $0x4] sm:$0xf]
    %v261 = vld [vmem:[#allocation9 + $0x8] sm:$0xf]
    %v262 = vld [vmem:[#allocation9 + $0xc] sm:$0xf]
    %v263 = vld [vmem:[#allocation9 + $0x10] sm:$0xf]
    %v264 = vld [vmem:[#allocation9 + $0x14] sm:$0xf]
    %v265 = vld [vmem:[#allocation9 + $0x18] sm:$0xf]
    %v266 = vld [vmem:[#allocation9 + $0x1c] sm:$0xf]
    %v267 = vld [vmem:[#allocation9 + $0x20] sm:$0xf]
    %v268 = vld [vmem:[#allocation9 + $0x24] sm:$0xf]
    %v269 = vld [vmem:[#allocation9 + $0x28] sm:$0xf]
    %v270 = vld [vmem:[#allocation9 + $0x2c] sm:$0xf]
    %v271 = vld [vmem:[#allocation9 + $0x30] sm:$0xf]
    %v272 = vld [vmem:[#allocation9 + $0x34] sm:$0xf]
    %v273 = vld [vmem:[#allocation9 + $0x38] sm:$0xf]
    %v274 = vld [vmem:[#allocation9 + $0x3c] sm:$0xf]
    %v275 = vld [vmem:[#allocation9 + $0x40] sm:$0xf]
    %v276 = vld [vmem:[#allocation9 + $0x44] sm:$0xf]
    %v277 = vld [vmem:[#allocation9 + $0x48] sm:$0xf]
    %v278 = vld [vmem:[#allocation9 + $0x4c] sm:$0xf]
    %v279 = vld [vmem:[#allocation9 + $0x50] sm:$0xf]
    %v280 = vld [vmem:[#allocation9 + $0x54] sm:$0xf]
    %v281 = vld [vmem:[#allocation9 + $0x58] sm:$0xf]
    %v282 = vld [vmem:[#allocation9 + $0x5c] sm:$0xf]
    %v283 = vld [vmem:[#allocation9 + $0x60] sm:$0xf]
    %v284 = vld [vmem:[#allocation9 + $0x64] sm:$0xf]
    %v285 = vld [vmem:[#allocation9 + $0x68] sm:$0xf]
    %v286 = vld [vmem:[#allocation9 + $0x6c] sm:$0xf]
    %v287 = vld [vmem:[#allocation9 + $0x70] sm:$0xf]
    %v288 = vld [vmem:[#allocation9 + $0x74] sm:$0xf]
    %v289 = vld [vmem:[#allocation9 + $0x78] sm:$0xf]
    %v290 = vld [vmem:[#allocation9 + $0x7c] sm:$0xf]
    %v291 = vld [vmem:[#allocation9 + $0x80] sm:$0xf]
    %v292 = vld [vmem:[#allocation9 + $0x84] sm:$0xf]
    %v293 = vld [vmem:[#allocation9 + $0x88] sm:$0xf]
    %v294 = vld [vmem:[#allocation9 + $0x8c] sm:$0xf]
    %v295 = vld [vmem:[#allocation9 + $0x90] sm:$0xf]
    %v296 = vld [vmem:[#allocation9 + $0x94] sm:$0xf]
    %v297 = vld [vmem:[#allocation9 + $0x98] sm:$0xf]
    %v298 = vld [vmem:[#allocation9 + $0x9c] sm:$0xf]
    %v299 = vld [vmem:[#allocation9 + $0xa0] sm:$0xf]
    %v300 = vld [vmem:[#allocation9 + $0xa4] sm:$0xf]
    %v301 = vld [vmem:[#allocation9 + $0xa8] sm:$0xf]
    %v302 = vld [vmem:[#allocation9 + $0xac] sm:$0xf]
    %v303 = vld [vmem:[#allocation9 + $0xb0] sm:$0xf]
    %v304 = vld [vmem:[#allocation9 + $0xb4] sm:$0xf]
    %v305 = vld [vmem:[#allocation9 + $0xb8] sm:$0xf]
    %v306 = vld [vmem:[#allocation9 + $0xbc] sm:$0xf]
    %v307 = vld [vmem:[#allocation9 + $0xc0] sm:$0xf]
    %v308 = vld [vmem:[#allocation9 + $0xc4] sm:$0xf]
    %v309 = vld [vmem:[#allocation9 + $0xc8] sm:$0xf]
    %v310 = vld [vmem:[#allocation9 + $0xcc] sm:$0xf]
    %v311 = vld [vmem:[#allocation9 + $0xd0] sm:$0xf]
    %v312 = vld [vmem:[#allocation9 + $0xd4] sm:$0xf]
    %v313 = vld [vmem:[#allocation9 + $0xd8] sm:$0xf]
    %v314 = vld [vmem:[#allocation9 + $0xdc] sm:$0xf]
    %v315 = vld [vmem:[#allocation9 + $0xe0] sm:$0xf]
    %v316 = vld [vmem:[#allocation9 + $0xe4] sm:$0xf]
    %v317 = vld [vmem:[#allocation9 + $0xe8] sm:$0xf]
    %v318 = vld [vmem:[#allocation9 + $0xec] sm:$0xf]
    %v319 = vld [vmem:[#allocation9 + $0xf0] sm:$0xf]
    %v320 = vld [vmem:[#allocation9 + $0xf4] sm:$0xf]
    %v321 = vld [vmem:[#allocation9 + $0xf8] sm:$0xf]
    %v322 = vld [vmem:[#allocation9 + $0xfc] sm:$0xf]
    %v323 = vld [vmem:[#allocation9 + $0x100] sm:$0xf]
    %v324 = vld [vmem:[#allocation9 + $0x104] sm:$0xf]
    %v325 = vld [vmem:[#allocation9 + $0x108] sm:$0xf]
    %v326 = vld [vmem:[#allocation9 + $0x10c] sm:$0xf]
    %v327 = vld [vmem:[#allocation9 + $0x110] sm:$0xf]
    %v328 = vld [vmem:[#allocation9 + $0x114] sm:$0xf]
    %v329 = vld [vmem:[#allocation9 + $0x118] sm:$0xf]
    %v330 = vld [vmem:[#allocation9 + $0x11c] sm:$0xf]
    %v331 = vld [vmem:[#allocation9 + $0x120] sm:$0xf]
    %v332 = vld [vmem:[#allocation9 + $0x124] sm:$0xf]
    %v333 = vld [vmem:[#allocation9 + $0x128] sm:$0xf]
    %v334 = vld [vmem:[#allocation9 + $0x12c] sm:$0xf]
    %v335 = vld [vmem:[#allocation9 + $0x130] sm:$0xf]
    %v336 = vld [vmem:[#allocation9 + $0x134] sm:$0xf]
    %v337 = vld [vmem:[#allocation9 + $0x138] sm:$0xf]
    %v338 = vld [vmem:[#allocation9 + $0x13c] sm:$0xf]
    %v339 = vld [vmem:[#allocation9 + $0x140] sm:$0xf]
    %v340 = vld [vmem:[#allocation9 + $0x144] sm:$0xf]
    %v341 = vld [vmem:[#allocation9 + $0x148] sm:$0xf]
    %v342 = vld [vmem:[#allocation9 + $0x14c] sm:$0xf]
    %v343 = vld [vmem:[#allocation9 + $0x150] sm:$0xf]
    %v344 = vld [vmem:[#allocation9 + $0x154] sm:$0xf]
    %v345 = vld [vmem:[#allocation9 + $0x158] sm:$0xf]
    %v346 = vld [vmem:[#allocation9 + $0x15c] sm:$0xf]
    %v347 = vld [vmem:[#allocation9 + $0x160] sm:$0xf]
    %v348 = vld [vmem:[#allocation9 + $0x164] sm:$0xf]
    %v349 = vld [vmem:[#allocation9 + $0x168] sm:$0xf]
    %v350 = vld [vmem:[#allocation9 + $0x16c] sm:$0xf]
    %v351 = vld [vmem:[#allocation9 + $0x170] sm:$0xf]
    %v352 = vld [vmem:[#allocation9 + $0x174] sm:$0xf]
    %v353 = vld [vmem:[#allocation9 + $0x178] sm:$0xf]
    %v354 = vld [vmem:[#allocation9 + $0x17c] sm:$0xf]
    %v451 = vunpack.c.l.b16 %v259
    %v452 = vunpack.c.l.b16 %v260
    %v453 = vunpack.c.l.b16 %v261
    %v454 = vunpack.c.l.b16 %v262
    %v455 = vunpack.c.l.b16 %v263
    %v456 = vunpack.c.l.b16 %v264
    %v457 = vunpack.c.l.b16 %v265
    %v458 = vunpack.c.l.b16 %v266
    %v459 = vunpack.c.l.b16 %v267
    %v460 = vunpack.c.l.b16 %v268
    %v461 = vunpack.c.l.b16 %v269
    %v462 = vunpack.c.l.b16 %v270
    %v463 = vunpack.c.l.b16 %v271
    %v464 = vunpack.c.l.b16 %v272
    %v465 = vunpack.c.l.b16 %v273
    %v466 = vunpack.c.l.b16 %v274
    %v467 = vunpack.c.l.b16 %v275
    %v468 = vunpack.c.l.b16 %v276
    %v469 = vunpack.c.l.b16 %v277
    %v470 = vunpack.c.l.b16 %v278
    %v471 = vunpack.c.l.b16 %v279
    %v472 = vunpack.c.l.b16 %v280
    %v473 = vunpack.c.l.b16 %v281
    %v474 = vunpack.c.l.b16 %v282
    %v475 = vunpack.c.l.b16 %v283
    %v476 = vunpack.c.l.b16 %v284
    %v477 = vunpack.c.l.b16 %v285
    %v478 = vunpack.c.l.b16 %v286
    %v479 = vunpack.c.l.b16 %v287
    %v480 = vunpack.c.l.b16 %v288
    %v481 = vunpack.c.l.b16 %v289
    %v482 = vunpack.c.l.b16 %v290
    %v483 = vunpack.c.l.b16 %v291
    %v484 = vunpack.c.l.b16 %v292
    %v485 = vunpack.c.l.b16 %v293
    %v486 = vunpack.c.l.b16 %v294
    %v487 = vunpack.c.l.b16 %v295
    %v488 = vunpack.c.l.b16 %v296
    %v489 = vunpack.c.l.b16 %v297
    %v490 = vunpack.c.l.b16 %v298
    %v491 = vunpack.c.l.b16 %v299
    %v492 = vunpack.c.l.b16 %v300
    %v493 = vunpack.c.l.b16 %v301
    %v494 = vunpack.c.l.b16 %v302
    %v495 = vunpack.c.l.b16 %v303
    %v496 = vunpack.c.l.b16 %v304
    %v497 = vunpack.c.l.b16 %v305
    %v498 = vunpack.c.l.b16 %v306
    %v499 = vunpack.c.l.b16 %v307
    %v500 = vunpack.c.l.b16 %v308
    %v501 = vunpack.c.l.b16 %v309
    %v502 = vunpack.c.l.b16 %v310
    %v503 = vunpack.c.l.b16 %v311
    %v504 = vunpack.c.l.b16 %v312
    %v505 = vunpack.c.l.b16 %v313
    %v506 = vunpack.c.l.b16 %v314
    %v507 = vunpack.c.l.b16 %v315
    %v508 = vunpack.c.l.b16 %v316
    %v509 = vunpack.c.l.b16 %v317
    %v510 = vunpack.c.l.b16 %v318
    %v511 = vunpack.c.l.b16 %v319
    %v512 = vunpack.c.l.b16 %v320
    %v513 = vunpack.c.l.b16 %v321
    %v514 = vunpack.c.l.b16 %v322
    %v515 = vunpack.c.l.b16 %v323
    %v516 = vunpack.c.l.b16 %v324
    %v517 = vunpack.c.l.b16 %v325
    %v518 = vunpack.c.l.b16 %v326
    %v519 = vunpack.c.l.b16 %v327
    %v520 = vunpack.c.l.b16 %v328
    %v521 = vunpack.c.l.b16 %v329
    %v522 = vunpack.c.l.b16 %v330
    %v523 = vunpack.c.l.b16 %v331
    %v524 = vunpack.c.l.b16 %v332
    %v525 = vunpack.c.l.b16 %v333
    %v526 = vunpack.c.l.b16 %v334
    %v527 = vunpack.c.l.b16 %v335
    %v528 = vunpack.c.l.b16 %v336
    %v529 = vunpack.c.l.b16 %v337
    %v530 = vunpack.c.l.b16 %v338
    %v531 = vunpack.c.l.b16 %v339
    %v532 = vunpack.c.l.b16 %v340
    %v533 = vunpack.c.l.b16 %v341
    %v534 = vunpack.c.l.b16 %v342
    %v535 = vunpack.c.l.b16 %v343
    %v536 = vunpack.c.l.b16 %v344
    %v537 = vunpack.c.l.b16 %v345
    %v538 = vunpack.c.l.b16 %v346
    %v539 = vunpack.c.l.b16 %v347
    %v540 = vunpack.c.l.b16 %v348
    %v541 = vunpack.c.l.b16 %v349
    %v542 = vunpack.c.l.b16 %v350
    %v543 = vunpack.c.l.b16 %v351
    %v544 = vunpack.c.l.b16 %v352
    %v545 = vunpack.c.l.b16 %v353
    %v546 = vunpack.c.l.b16 %v354
    %v547 = vpack.c.b16 %v452, %v451
    %v548 = vpack.c.b16 %v454, %v453
    %v549 = vpack.c.b16 %v456, %v455
    %v550 = vpack.c.b16 %v458, %v457
    %v551 = vpack.c.b16 %v460, %v459
    %v552 = vpack.c.b16 %v462, %v461
    %v553 = vpack.c.b16 %v464, %v463
    %v554 = vpack.c.b16 %v466, %v465
    %v555 = vpack.c.b16 %v468, %v467
    %v556 = vpack.c.b16 %v470, %v469
    %v557 = vpack.c.b16 %v472, %v471
    %v558 = vpack.c.b16 %v474, %v473
    %v559 = vpack.c.b16 %v476, %v475
    %v560 = vpack.c.b16 %v478, %v477
    %v561 = vpack.c.b16 %v480, %v479
    %v562 = vpack.c.b16 %v482, %v481
    %v563 = vpack.c.b16 %v484, %v483
    %v564 = vpack.c.b16 %v486, %v485
    %v565 = vpack.c.b16 %v488, %v487
    %v566 = vpack.c.b16 %v490, %v489
    %v567 = vpack.c.b16 %v492, %v491
    %v568 = vpack.c.b16 %v494, %v493
    %v569 = vpack.c.b16 %v496, %v495
    %v570 = vpack.c.b16 %v498, %v497
    %v571 = vpack.c.b16 %v500, %v499
    %v572 = vpack.c.b16 %v502, %v501
    %v573 = vpack.c.b16 %v504, %v503
    %v574 = vpack.c.b16 %v506, %v505
    %v575 = vpack.c.b16 %v508, %v507
    %v576 = vpack.c.b16 %v510, %v509
    %v577 = vpack.c.b16 %v512, %v511
    %v578 = vpack.c.b16 %v514, %v513
    %v579 = vpack.c.b16 %v516, %v515
    %v580 = vpack.c.b16 %v518, %v517
    %v581 = vpack.c.b16 %v520, %v519
    %v582 = vpack.c.b16 %v522, %v521
    %v583 = vpack.c.b16 %v524, %v523
    %v584 = vpack.c.b16 %v526, %v525
    %v585 = vpack.c.b16 %v528, %v527
    %v586 = vpack.c.b16 %v530, %v529
    %v587 = vpack.c.b16 %v532, %v531
    %v588 = vpack.c.b16 %v534, %v533
    %v589 = vpack.c.b16 %v536, %v535
    %v590 = vpack.c.b16 %v538, %v537
    %v591 = vpack.c.b16 %v540, %v539
    %v592 = vpack.c.b16 %v542, %v541
    %v593 = vpack.c.b16 %v544, %v543
    %v594 = vpack.c.b16 %v546, %v545
    %643 = vmatprep.subr.bf16.mxu0 0
    %644 = vmatpush1.bf16.msra.mxu0 %v547
    %645 = vmatprep.subr.bf16.mxu0 0
    %646 = vmatpush1.bf16.msra.mxu0 %v548
    %647 = vmatprep.subr.bf16.mxu0 0
    %648 = vmatpush1.bf16.msra.mxu0 %v549
    %649 = vmatprep.subr.bf16.mxu0 0
    %650 = vmatpush1.bf16.msra.mxu0 %v550
    %651 = vmatprep.subr.bf16.mxu0 0
    %652 = vmatpush1.bf16.msra.mxu0 %v551
    %653 = vmatprep.subr.bf16.mxu0 0
    %654 = vmatpush1.bf16.msra.mxu0 %v552
    %655 = vmatprep.subr.bf16.mxu0 0
    %656 = vmatpush1.bf16.msra.mxu0 %v553
    %657 = vmatprep.subr.bf16.mxu0 0
    %658 = vmatpush1.bf16.msra.mxu0 %v554
    %659 = vmatprep.subr.bf16.mxu0 0
    %660 = vmatpush1.bf16.msra.mxu0 %v555
    %661 = vmatprep.subr.bf16.mxu0 0
    %662 = vmatpush1.bf16.msra.mxu0 %v556
    %663 = vmatprep.subr.bf16.mxu0 0
    %664 = vmatpush1.bf16.msra.mxu0 %v557
    %665 = vmatprep.subr.bf16.mxu0 0
    %666 = vmatpush1.bf16.msra.mxu0 %v558
    %667 = vmatprep.subr.bf16.mxu0 0
    %668 = vmatpush1.bf16.msra.mxu0 %v559
    %669 = vmatprep.subr.bf16.mxu0 0
    %670 = vmatpush1.bf16.msra.mxu0 %v560
    %671 = vmatprep.subr.bf16.mxu0 0
    %672 = vmatpush1.bf16.msra.mxu0 %v561
    %673 = vmatprep.subr.bf16.mxu0 0
    %674 = vmatpush1.bf16.msra.mxu0 %v562
    %675 = vmatprep.mubr.bf16.mxu0 %v254
    %676 = vmatmul.mubr.bf16.gmra.mrb[0].mxu0 %v253
    %v677 = vpop.f32.mrb[0].mxu0
    %v678 = vadd.f32 0.0, %v677
    %v679 = vpop.f32.mrb[0].mxu0
    %v680 = vpop.f32.mrb[0].mxu0
    %v681 = vpop.f32.mrb[0].mxu0
    %682 = vdwg.mxu0
    %683 = vmatprep.subr.bf16.mxu0 0
    %684 = vmatpush1.bf16.msra.mxu0 %v563
    %685 = vmatprep.subr.bf16.mxu0 0
    %686 = vmatpush1.bf16.msra.mxu0 %v564
    %687 = vmatprep.subr.bf16.mxu0 0
    %688 = vmatpush1.bf16.msra.mxu0 %v565
    %689 = vmatprep.subr.bf16.mxu0 0
    %690 = vmatpush1.bf16.msra.mxu0 %v566
    %691 = vmatprep.subr.bf16.mxu0 0
    %692 = vmatpush1.bf16.msra.mxu0 %v567
    %693 = vmatprep.subr.bf16.mxu0 0
    %694 = vmatpush1.bf16.msra.mxu0 %v568
    %695 = vmatprep.subr.bf16.mxu0 0
    %696 = vmatpush1.bf16.msra.mxu0 %v569
    %697 = vmatprep.subr.bf16.mxu0 0
    %698 = vmatpush1.bf16.msra.mxu0 %v570
    %699 = vmatprep.subr.bf16.mxu0 0
    %700 = vmatpush1.bf16.msra.mxu0 %v571
    %701 = vmatprep.subr.bf16.mxu0 0
    %702 = vmatpush1.bf16.msra.mxu0 %v572
    %703 = vmatprep.subr.bf16.mxu0 0
    %704 = vmatpush1.bf16.msra.mxu0 %v573
    %705 = vmatprep.subr.bf16.mxu0 0
    %706 = vmatpush1.bf16.msra.mxu0 %v574
    %707 = vmatprep.subr.bf16.mxu0 0
    %708 = vmatpush1.bf16.msra.mxu0 %v575
    %709 = vmatprep.subr.bf16.mxu0 0
    %710 = vmatpush1.bf16.msra.mxu0 %v576
    %711 = vmatprep.subr.bf16.mxu0 0
    %712 = vmatpush1.bf16.msra.mxu0 %v577
    %713 = vmatprep.subr.bf16.mxu0 0
    %714 = vmatpush1.bf16.msra.mxu0 %v578
    %715 = vmatprep.mubr.bf16.mxu0 %v256
    %716 = vmatmul.mubr.bf16.gmra.mrb[0].mxu0 %v255
    %v717 = vpop.f32.mrb[0].mxu0
    %v718 = vadd.f32 %v678, %v717
    %v719 = vpop.f32.mrb[0].mxu0
    %v720 = vpop.f32.mrb[0].mxu0
    %v721 = vpop.f32.mrb[0].mxu0
    %722 = vdwg.mxu0
    %723 = vmatprep.subr.bf16.mxu0 0
    %724 = vmatpush1.bf16.msra.mxu0 %v579
    %725 = vmatprep.subr.bf16.mxu0 0
    %726 = vmatpush1.bf16.msra.mxu0 %v580
    %727 = vmatprep.subr.bf16.mxu0 0
    %728 = vmatpush1.bf16.msra.mxu0 %v581
    %729 = vmatprep.subr.bf16.mxu0 0
    %730 = vmatpush1.bf16.msra.mxu0 %v582
    %731 = vmatprep.subr.bf16.mxu0 0
    %732 = vmatpush1.bf16.msra.mxu0 %v583
    %733 = vmatprep.subr.bf16.mxu0 0
    %734 = vmatpush1.bf16.msra.mxu0 %v584
    %735 = vmatprep.subr.bf16.mxu0 0
    %736 = vmatpush1.bf16.msra.mxu0 %v585
    %737 = vmatprep.subr.bf16.mxu0 0
    %738 = vmatpush1.bf16.msra.mxu0 %v586
    %739 = vmatprep.subr.bf16.mxu0 0
    %740 = vmatpush1.bf16.msra.mxu0 %v587
    %741 = vmatprep.subr.bf16.mxu0 0
    %742 = vmatpush1.bf16.msra.mxu0 %v588
    %743 = vmatprep.subr.bf16.mxu0 0
    %744 = vmatpush1.bf16.msra.mxu0 %v589
    %745 = vmatprep.subr.bf16.mxu0 0
    %746 = vmatpush1.bf16.msra.mxu0 %v590
    %747 = vmatprep.subr.bf16.mxu0 0
    %748 = vmatpush1.bf16.msra.mxu0 %v591
    %749 = vmatprep.subr.bf16.mxu0 0
    %750 = vmatpush1.bf16.msra.mxu0 %v592
    %751 = vmatprep.subr.bf16.mxu0 0
    %752 = vmatpush1.bf16.msra.mxu0 %v593
    %753 = vmatprep.subr.bf16.mxu0 0
    %754 = vmatpush1.bf16.msra.mxu0 %v594
    %755 = vmatprep.mubr.bf16.mxu0 %v258
    %756 = vmatmul.mubr.bf16.gmra.mrb[0].mxu0 %v257
    %v757 = vpop.f32.mrb[0].mxu0
    %v758 = vadd.f32 %v718, %v757
    %v759 = vpop.f32.mrb[0].mxu0
    %v760 = vpop.f32.mrb[0].mxu0
    %v761 = vpop.f32.mrb[0].mxu0
    %762 = vdwg.mxu0
    %v891 = vunpack.c.l.b16 %v119
    %v892 = vunpack.c.l.b16 %v120
    %v893 = vunpack.c.l.b16 %v121
    %v894 = vunpack.c.l.b16 %v122
    %v895 = vunpack.c.l.b16 %v123
    %v896 = vunpack.c.l.b16 %v124
    %v897 = vunpack.c.l.b16 %v125
    %v898 = vunpack.c.l.b16 %v126
    %v899 = vunpack.c.l.b16 %v127
    %v900 = vunpack.c.l.b16 %v128
    %v901 = vunpack.c.l.b16 %v129
    %v902 = vunpack.c.l.b16 %v130
    %v903 = vunpack.c.l.b16 %v131
    %v904 = vunpack.c.l.b16 %v132
    %v905 = vunpack.c.l.b16 %v133
    %v906 = vunpack.c.l.b16 %v134
    %v907 = vunpack.c.l.b16 %v135
    %v908 = vunpack.c.l.b16 %v136
    %v909 = vunpack.c.l.b16 %v137
    %v910 = vunpack.c.l.b16 %v138
    %v911 = vunpack.c.l.b16 %v139
    %v912 = vunpack.c.l.b16 %v140
    %v913 = vunpack.c.l.b16 %v141
    %v914 = vunpack.c.l.b16 %v142
    %v915 = vunpack.c.l.b16 %v143
    %v916 = vunpack.c.l.b16 %v144
    %v917 = vunpack.c.l.b16 %v145
    %v918 = vunpack.c.l.b16 %v146
    %v919 = vunpack.c.l.b16 %v147
    %v920 = vunpack.c.l.b16 %v148
    %v921 = vunpack.c.l.b16 %v149
    %v922 = vunpack.c.l.b16 %v150
    %v923 = vunpack.c.l.b16 %v151
    %v924 = vunpack.c.l.b16 %v152
    %v925 = vunpack.c.l.b16 %v153
    %v926 = vunpack.c.l.b16 %v154
    %v927 = vunpack.c.l.b16 %v155
    %v928 = vunpack.c.l.b16 %v156
    %v929 = vunpack.c.l.b16 %v157
    %v930 = vunpack.c.l.b16 %v158
    %v931 = vunpack.c.l.b16 %v159
    %v932 = vunpack.c.l.b16 %v160
    %v933 = vunpack.c.l.b16 %v161
    %v934 = vunpack.c.l.b16 %v162
    %v935 = vunpack.c.l.b16 %v163
    %v936 = vunpack.c.l.b16 %v164
    %v937 = vunpack.c.l.b16 %v165
    %v938 = vunpack.c.l.b16 %v166
    %v939 = vunpack.c.l.b16 %v167
    %v940 = vunpack.c.l.b16 %v168
    %v941 = vunpack.c.l.b16 %v169
    %v942 = vunpack.c.l.b16 %v170
    %v943 = vunpack.c.l.b16 %v171
    %v944 = vunpack.c.l.b16 %v172
    %v945 = vunpack.c.l.b16 %v173
    %v946 = vunpack.c.l.b16 %v174
    %v947 = vunpack.c.l.b16 %v175
    %v948 = vunpack.c.l.b16 %v176
    %v949 = vunpack.c.l.b16 %v177
    %v950 = vunpack.c.l.b16 %v178
    %v951 = vunpack.c.l.b16 %v179
    %v952 = vunpack.c.l.b16 %v180
    %v953 = vunpack.c.l.b16 %v181
    %v954 = vunpack.c.l.b16 %v182
    %v955 = vunpack.c.l.b16 %v183
    %v956 = vunpack.c.l.b16 %v184
    %v957 = vunpack.c.l.b16 %v185
    %v958 = vunpack.c.l.b16 %v186
    %v959 = vunpack.c.l.b16 %v187
    %v960 = vunpack.c.l.b16 %v188
    %v961 = vunpack.c.l.b16 %v189
    %v962 = vunpack.c.l.b16 %v190
    %v963 = vunpack.c.l.b16 %v191
    %v964 = vunpack.c.l.b16 %v192
    %v965 = vunpack.c.l.b16 %v193
    %v966 = vunpack.c.l.b16 %v194
    %v967 = vunpack.c.l.b16 %v195
    %v968 = vunpack.c.l.b16 %v196
    %v969 = vunpack.c.l.b16 %v197
    %v970 = vunpack.c.l.b16 %v198
    %v971 = vunpack.c.l.b16 %v199
    %v972 = vunpack.c.l.b16 %v200
    %v973 = vunpack.c.l.b16 %v201
    %v974 = vunpack.c.l.b16 %v202
    %v975 = vunpack.c.l.b16 %v203
    %v976 = vunpack.c.l.b16 %v204
    %v977 = vunpack.c.l.b16 %v205
    %v978 = vunpack.c.l.b16 %v206
    %v979 = vunpack.c.l.b16 %v207
    %v980 = vunpack.c.l.b16 %v208
    %v981 = vunpack.c.l.b16 %v209
    %v982 = vunpack.c.l.b16 %v210
    %v983 = vunpack.c.l.b16 %v211
    %v984 = vunpack.c.l.b16 %v212
    %v985 = vunpack.c.l.b16 %v213
    %v986 = vunpack.c.l.b16 %v214
    %v987 = vunpack.c.l.b16 %v215
    %v988 = vunpack.c.l.b16 %v216
    %v989 = vunpack.c.l.b16 %v217
    %v990 = vunpack.c.l.b16 %v218
    %v991 = vunpack.c.l.b16 %v219
    %v992 = vunpack.c.l.b16 %v220
    %v993 = vunpack.c.l.b16 %v221
    %v994 = vunpack.c.l.b16 %v222
    %v995 = vunpack.c.l.b16 %v223
    %v996 = vunpack.c.l.b16 %v224
    %v997 = vunpack.c.l.b16 %v225
    %v998 = vunpack.c.l.b16 %v226
    %v999 = vunpack.c.l.b16 %v227
    %v1000 = vunpack.c.l.b16 %v228
    %v1001 = vunpack.c.l.b16 %v229
    %v1002 = vunpack.c.l.b16 %v230
    %v1003 = vunpack.c.l.b16 %v231
    %v1004 = vunpack.c.l.b16 %v232
    %v1005 = vunpack.c.l.b16 %v233
    %v1006 = vunpack.c.l.b16 %v234
    %v1007 = vunpack.c.l.b16 %v235
    %v1008 = vunpack.c.l.b16 %v236
    %v1009 = vunpack.c.l.b16 %v237
    %v1010 = vunpack.c.l.b16 %v238
    %v1011 = vunpack.c.l.b16 %v239
    %v1012 = vunpack.c.l.b16 %v240
    %v1013 = vunpack.c.l.b16 %v241
    %v1014 = vunpack.c.l.b16 %v242
    %v1015 = vunpack.c.l.b16 %v243
    %v1016 = vunpack.c.l.b16 %v244
    %v1017 = vunpack.c.l.b16 %v245
    %v1018 = vunpack.c.l.b16 %v246
    %v1019 = vpack.c.b16 %v892, %v891
    %v1020 = vpack.c.b16 %v894, %v893
    %v1021 = vpack.c.b16 %v896, %v895
    %v1022 = vpack.c.b16 %v898, %v897
    %v1023 = vpack.c.b16 %v900, %v899
    %v1024 = vpack.c.b16 %v902, %v901
    %v1025 = vpack.c.b16 %v904, %v903
    %v1026 = vpack.c.b16 %v906, %v905
    %v1027 = vpack.c.b16 %v908, %v907
    %v1028 = vpack.c.b16 %v910, %v909
    %v1029 = vpack.c.b16 %v912, %v911
    %v1030 = vpack.c.b16 %v914, %v913
    %v1031 = vpack.c.b16 %v916, %v915
    %v1032 = vpack.c.b16 %v918, %v917
    %v1033 = vpack.c.b16 %v920, %v919
    %v1034 = vpack.c.b16 %v922, %v921
    %v1035 = vpack.c.b16 %v924, %v923
    %v1036 = vpack.c.b16 %v926, %v925
    %v1037 = vpack.c.b16 %v928, %v927
    %v1038 = vpack.c.b16 %v930, %v929
    %v1039 = vpack.c.b16 %v932, %v931
    %v1040 = vpack.c.b16 %v934, %v933
    %v1041 = vpack.c.b16 %v936, %v935
    %v1042 = vpack.c.b16 %v938, %v937
    %v1043 = vpack.c.b16 %v940, %v939
    %v1044 = vpack.c.b16 %v942, %v941
    %v1045 = vpack.c.b16 %v944, %v943
    %v1046 = vpack.c.b16 %v946, %v945
    %v1047 = vpack.c.b16 %v948, %v947
    %v1048 = vpack.c.b16 %v950, %v949
    %v1049 = vpack.c.b16 %v952, %v951
    %v1050 = vpack.c.b16 %v954, %v953
    %v1051 = vpack.c.b16 %v956, %v955
    %v1052 = vpack.c.b16 %v958, %v957
    %v1053 = vpack.c.b16 %v960, %v959
    %v1054 = vpack.c.b16 %v962, %v961
    %v1055 = vpack.c.b16 %v964, %v963
    %v1056 = vpack.c.b16 %v966, %v965
    %v1057 = vpack.c.b16 %v968, %v967
    %v1058 = vpack.c.b16 %v970, %v969
    %v1059 = vpack.c.b16 %v972, %v971
    %v1060 = vpack.c.b16 %v974, %v973
    %v1061 = vpack.c.b16 %v976, %v975
    %v1062 = vpack.c.b16 %v978, %v977
    %v1063 = vpack.c.b16 %v980, %v979
    %v1064 = vpack.c.b16 %v982, %v981
    %v1065 = vpack.c.b16 %v984, %v983
    %v1066 = vpack.c.b16 %v986, %v985
    %v1067 = vpack.c.b16 %v988, %v987
    %v1068 = vpack.c.b16 %v990, %v989
    %v1069 = vpack.c.b16 %v992, %v991
    %v1070 = vpack.c.b16 %v994, %v993
    %v1071 = vpack.c.b16 %v996, %v995
    %v1072 = vpack.c.b16 %v998, %v997
    %v1073 = vpack.c.b16 %v1000, %v999
    %v1074 = vpack.c.b16 %v1002, %v1001
    %v1075 = vpack.c.b16 %v1004, %v1003
    %v1076 = vpack.c.b16 %v1006, %v1005
    %v1077 = vpack.c.b16 %v1008, %v1007
    %v1078 = vpack.c.b16 %v1010, %v1009
    %v1079 = vpack.c.b16 %v1012, %v1011
    %v1080 = vpack.c.b16 %v1014, %v1013
    %v1081 = vpack.c.b16 %v1016, %v1015
    %v1082 = vpack.c.b16 %v1018, %v1017
    %1147 = vmatprep.subr.bf16.mxu0 0
    %1148 = vmatpush1.bf16.msra.mxu0 %v1019
    %1149 = vmatprep.subr.bf16.mxu0 0
    %1150 = vmatpush1.bf16.msra.mxu0 %v1020
    %1151 = vmatprep.subr.bf16.mxu0 0
    %1152 = vmatpush1.bf16.msra.mxu0 %v1021
    %1153 = vmatprep.subr.bf16.mxu0 0
    %1154 = vmatpush1.bf16.msra.mxu0 %v1022
    %1155 = vmatprep.subr.bf16.mxu0 0
    %1156 = vmatpush1.bf16.msra.mxu0 %v1023
    %1157 = vmatprep.subr.bf16.mxu0 0
    %1158 = vmatpush1.bf16.msra.mxu0 %v1024
    %1159 = vmatprep.subr.bf16.mxu0 0
    %1160 = vmatpush1.bf16.msra.mxu0 %v1025
    %1161 = vmatprep.subr.bf16.mxu0 0
    %1162 = vmatpush1.bf16.msra.mxu0 %v1026
    %1163 = vmatprep.subr.bf16.mxu0 0
    %1164 = vmatpush1.bf16.msra.mxu0 %v1027
    %1165 = vmatprep.subr.bf16.mxu0 0
    %1166 = vmatpush1.bf16.msra.mxu0 %v1028
    %1167 = vmatprep.subr.bf16.mxu0 0
    %1168 = vmatpush1.bf16.msra.mxu0 %v1029
    %1169 = vmatprep.subr.bf16.mxu0 0
    %1170 = vmatpush1.bf16.msra.mxu0 %v1030
    %1171 = vmatprep.subr.bf16.mxu0 0
    %1172 = vmatpush1.bf16.msra.mxu0 %v1031
    %1173 = vmatprep.subr.bf16.mxu0 0
    %1174 = vmatpush1.bf16.msra.mxu0 %v1032
    %1175 = vmatprep.subr.bf16.mxu0 0
    %1176 = vmatpush1.bf16.msra.mxu0 %v1033
    %1177 = vmatprep.subr.bf16.mxu0 0
    %1178 = vmatpush1.bf16.msra.mxu0 %v1034
    %1179 = vmatprep.mubr.bf16.mxu0 %v112
    %1180 = vmatmul.mubr.bf16.gmra.mrb[0].mxu0 %v111
    %v1181 = vpop.f32.mrb[0].mxu0
    %v1182 = vadd.f32 %v758, %v1181
    %v1183 = vpop.f32.mrb[0].mxu0
    %v1184 = vpop.f32.mrb[0].mxu0
    %v1185 = vpop.f32.mrb[0].mxu0
    %1186 = vdwg.mxu0
    %1187 = vmatprep.subr.bf16.mxu0 0
    %1188 = vmatpush1.bf16.msra.mxu0 %v1035
    %1189 = vmatprep.subr.bf16.mxu0 0
    %1190 = vmatpush1.bf16.msra.mxu0 %v1036
    %1191 = vmatprep.subr.bf16.mxu0 0
    %1192 = vmatpush1.bf16.msra.mxu0 %v1037
    %1193 = vmatprep.subr.bf16.mxu0 0
    %1194 = vmatpush1.bf16.msra.mxu0 %v1038
    %1195 = vmatprep.subr.bf16.mxu0 0
    %1196 = vmatpush1.bf16.msra.mxu0 %v1039
    %1197 = vmatprep.subr.bf16.mxu0 0
    %1198 = vmatpush1.bf16.msra.mxu0 %v1040
    %1199 = vmatprep.subr.bf16.mxu0 0
    %1200 = vmatpush1.bf16.msra.mxu0 %v1041
    %1201 = vmatprep.subr.bf16.mxu0 0
    %1202 = vmatpush1.bf16.msra.mxu0 %v1042
    %1203 = vmatprep.subr.bf16.mxu0 0
    %1204 = vmatpush1.bf16.msra.mxu0 %v1043
    %1205 = vmatprep.subr.bf16.mxu0 0
    %1206 = vmatpush1.bf16.msra.mxu0 %v1044
    %1207 = vmatprep.subr.bf16.mxu0 0
    %1208 = vmatpush1.bf16.msra.mxu0 %v1045
    %1209 = vmatprep.subr.bf16.mxu0 0
    %1210 = vmatpush1.bf16.msra.mxu0 %v1046
    %1211 = vmatprep.subr.bf16.mxu0 0
    %1212 = vmatpush1.bf16.msra.mxu0 %v1047
    %1213 = vmatprep.subr.bf16.mxu0 0
    %1214 = vmatpush1.bf16.msra.mxu0 %v1048
    %1215 = vmatprep.subr.bf16.mxu0 0
    %1216 = vmatpush1.bf16.msra.mxu0 %v1049
    %1217 = vmatprep.subr.bf16.mxu0 0
    %1218 = vmatpush1.bf16.msra.mxu0 %v1050
    %1219 = vmatprep.mubr.bf16.mxu0 %v114
    %1220 = vmatmul.mubr.bf16.gmra.mrb[0].mxu0 %v113
    %v1221 = vpop.f32.mrb[0].mxu0
    %v1222 = vadd.f32 %v1182, %v1221
    %v1223 = vpop.f32.mrb[0].mxu0
    %v1224 = vpop.f32.mrb[0].mxu0
    %v1225 = vpop.f32.mrb[0].mxu0
    %1226 = vdwg.mxu0
    %1227 = vmatprep.subr.bf16.mxu0 0
    %1228 = vmatpush1.bf16.msra.mxu0 %v1051
    %1229 = vmatprep.subr.bf16.mxu0 0
    %1230 = vmatpush1.bf16.msra.mxu0 %v1052
    %1231 = vmatprep.subr.bf16.mxu0 0
    %1232 = vmatpush1.bf16.msra.mxu0 %v1053
    %1233 = vmatprep.subr.bf16.mxu0 0
    %1234 = vmatpush1.bf16.msra.mxu0 %v1054
    %1235 = vmatprep.subr.bf16.mxu0 0
    %1236 = vmatpush1.bf16.msra.mxu0 %v1055
    %1237 = vmatprep.subr.bf16.mxu0 0
    %1238 = vmatpush1.bf16.msra.mxu0 %v1056
    %1239 = vmatprep.subr.bf16.mxu0 0
    %1240 = vmatpush1.bf16.msra.mxu0 %v1057
    %1241 = vmatprep.subr.bf16.mxu0 0
    %1242 = vmatpush1.bf16.msra.mxu0 %v1058
    %1243 = vmatprep.subr.bf16.mxu0 0
    %1244 = vmatpush1.bf16.msra.mxu0 %v1059
    %1245 = vmatprep.subr.bf16.mxu0 0
    %1246 = vmatpush1.bf16.msra.mxu0 %v1060
    %1247 = vmatprep.subr.bf16.mxu0 0
    %1248 = vmatpush1.bf16.msra.mxu0 %v1061
    %1249 = vmatprep.subr.bf16.mxu0 0
    %1250 = vmatpush1.bf16.msra.mxu0 %v1062
    %1251 = vmatprep.subr.bf16.mxu0 0
    %1252 = vmatpush1.bf16.msra.mxu0 %v1063
    %1253 = vmatprep.subr.bf16.mxu0 0
    %1254 = vmatpush1.bf16.msra.mxu0 %v1064
    %1255 = vmatprep.subr.bf16.mxu0 0
    %1256 = vmatpush1.bf16.msra.mxu0 %v1065
    %1257 = vmatprep.subr.bf16.mxu0 0
    %1258 = vmatpush1.bf16.msra.mxu0 %v1066
    %1259 = vmatprep.mubr.bf16.mxu0 %v116
    %1260 = vmatmul.mubr.bf16.gmra.mrb[0].mxu0 %v115
    %v1261 = vpop.f32.mrb[0].mxu0
    %v1262 = vadd.f32 %v1222, %v1261
    %v1263 = vpop.f32.mrb[0].mxu0
    %v1264 = vpop.f32.mrb[0].mxu0
    %v1265 = vpop.f32.mrb[0].mxu0
    %1266 = vdwg.mxu0
    %1267 = vmatprep.subr.bf16.mxu0 0
    %1268 = vmatpush1.bf16.msra.mxu0 %v1067
    %1269 = vmatprep.subr.bf16.mxu0 0
    %1270 = vmatpush1.bf16.msra.mxu0 %v1068
    %1271 = vmatprep.subr.bf16.mxu0 0
    %1272 = vmatpush1.bf16.msra.mxu0 %v1069
    %1273 = vmatprep.subr.bf16.mxu0 0
    %1274 = vmatpush1.bf16.msra.mxu0 %v1070
    %1275 = vmatprep.subr.bf16.mxu0 0
    %1276 = vmatpush1.bf16.msra.mxu0 %v1071
    %1277 = vmatprep.subr.bf16.mxu0 0
    %1278 = vmatpush1.bf16.msra.mxu0 %v1072
    %1279 = vmatprep.subr.bf16.mxu0 0
    %1280 = vmatpush1.bf16.msra.mxu0 %v1073
    %1281 = vmatprep.subr.bf16.mxu0 0
    %1282 = vmatpush1.bf16.msra.mxu0 %v1074
    %1283 = vmatprep.subr.bf16.mxu0 0
    %1284 = vmatpush1.bf16.msra.mxu0 %v1075
    %1285 = vmatprep.subr.bf16.mxu0 0
    %1286 = vmatpush1.bf16.msra.mxu0 %v1076
    %1287 = vmatprep.subr.bf16.mxu0 0
    %1288 = vmatpush1.bf16.msra.mxu0 %v1077
    %1289 = vmatprep.subr.bf16.mxu0 0
    %1290 = vmatpush1.bf16.msra.mxu0 %v1078
    %1291 = vmatprep.subr.bf16.mxu0 0
    %1292 = vmatpush1.bf16.msra.mxu0 %v1079
    %1293 = vmatprep.subr.bf16.mxu0 0
    %1294 = vmatpush1.bf16.msra.mxu0 %v1080
    %1295 = vmatprep.subr.bf16.mxu0 0
    %1296 = vmatpush1.bf16.msra.mxu0 %v1081
    %1297 = vmatprep.subr.bf16.mxu0 0
    %1298 = vmatpush1.bf16.msra.mxu0 %v1082
    %1299 = vmatprep.mubr.bf16.mxu0 %v118
    %1300 = vmatmul.mubr.bf16.gmra.mrb[0].mxu0 %v117
    %v1301 = vpop.f32.mrb[0].mxu0
    %v1302 = vadd.f32 %v1262, %v1301
    %v1303 = vpop.f32.mrb[0].mxu0
    %v1304 = vpop.f32.mrb[0].mxu0
    %v1305 = vpop.f32.mrb[0].mxu0
    %1306 = vdwg.mxu0
    %v1307 = vld [vmem:[#allocation6] sm:$0xff]
    %v1308 = vpack.c.bf16 %v1307, %v1307
    %v1309 = vld [vmem:[#allocation10] sm:$0xf]
    %v1310 = vld [vmem:[#allocation10 + $0x4] sm:$0xf]
    %v1311 = vld [vmem:[#allocation10 + $0x8] sm:$0xf]
    %v1312 = vld [vmem:[#allocation10 + $0xc] sm:$0xf]
    %v1313 = vld [vmem:[#allocation10 + $0x10] sm:$0x7]
    %v1319 = vunpack.c.l.b16 %v1309
    %v1320 = vunpack.c.l.b16 %v1310
    %v1321 = vunpack.c.l.b16 %v1311
    %v1322 = vunpack.c.l.b16 %v1312
    %v1323 = vunpack.c.l.b16 %v1313
    %v1324 = vpack.c.b16 %v1320, %v1319
    %v1325 = vpack.c.b16 %v1322, %v1321
    %v1326 = vpack.c.b16 %v1323, %v1323
    %vm1329 = vcmask 310272
    %v1331 = vsel %vm1329, %v1308, 0
    %vm1333 = vcmask 1042432
    %v1335 = vsel %vm1333, %v1326, 0
    %1337 = vmatprep.subr.bf16.mxu0 0
    %1338 = vmatpush1.bf16.msra.mxu0 %v1324
    %1339 = vmatprep.subr.bf16.mxu0 0
    %1340 = vmatpush1.bf16.msra.mxu0 %v1325
    %1341 = vmatprep.subr.bf16.mxu0 0
    %1342 = vmatpush1.bf16.msra.mxu0 %v1335
    %1343 = vmatprep.subr.bf16.mxu0 0
    %1344 = vmatpush1.bf16.msra.mxu0 0
    %1345 = vmatprep.subr.bf16.mxu0 0
    %1346 = vmatpush1.bf16.msra.mxu0 0
    %1347 = vmatprep.subr.bf16.mxu0 0
    %1348 = vmatpush1.bf16.msra.mxu0 0
    %1349 = vmatprep.subr.bf16.mxu0 0
    %1350 = vmatpush1.bf16.msra.mxu0 0
    %1351 = vmatprep.subr.bf16.mxu0 0
    %1352 = vmatpush1.bf16.msra.mxu0 0
    %1353 = vmatprep.subr.bf16.mxu0 0
    %1354 = vmatpush1.bf16.msra.mxu0 0
    %1355 = vmatprep.subr.bf16.mxu0 0
    %1356 = vmatpush1.bf16.msra.mxu0 0
    %1357 = vmatprep.subr.bf16.mxu0 0
    %1358 = vmatpush1.bf16.msra.mxu0 0
    %1359 = vmatprep.subr.bf16.mxu0 0
    %1360 = vmatpush1.bf16.msra.mxu0 0
    %1361 = vmatprep.subr.bf16.mxu0 0
    %1362 = vmatpush1.bf16.msra.mxu0 0
    %1363 = vmatprep.subr.bf16.mxu0 0
    %1364 = vmatpush1.bf16.msra.mxu0 0
    %1365 = vmatprep.subr.bf16.mxu0 0
    %1366 = vmatpush1.bf16.msra.mxu0 0
    %1367 = vmatprep.subr.bf16.mxu0 0
    %1368 = vmatpush1.bf16.msra.mxu0 0
    %1369 = vmatprep.mubr.bf16.mxu0 0
    %1370 = vmatmul.mubr.bf16.gmra.mrb[0].mxu0 %v1331
    %v1371 = vpop.f32.mrb[0].mxu0
    %v1372 = vadd.f32 0.0, %v1371
    %v1373 = vpop.f32.mrb[0].mxu0
    %v1374 = vpop.f32.mrb[0].mxu0
    %v1375 = vpop.f32.mrb[0].mxu0
    %1376 = vdwg.mxu0
    %v1377 = vadd.f32 %v1302, %v1372
    %v1378 = vld [vmem:[%s6] sm:$0x1]
    %v1379 = vlaneseq
    %v1380 = vshrl.u32 %v1379, 7
    %v1381 = vsub.s32 0, %v1380
    %v1382 = vrot.slane %v1378, %v1381
    %v1383 = vadd.f32 %v1377, %v1382
    %v1384 = vmax.f32 %v1383, 0.0
    %v1385 = vld [vmem:[%s6 + $0x1] sm:$0x1]
    %v1386 = vlaneseq
    %v1387 = vshrl.u32 %v1386, 7
    %v1388 = vsub.s32 0, %v1387
    %v1389 = vrot.slane %v1385, %v1388
    %v1390 = vmul.f32 %v1384, %v1389
    %1391 = vadd.xlane.f32.xlu0 %v1390
    %v1392 = vpop.xlane.xlu0 %1391
    %v1393 = vld [vmem:[%s6 + $0x2] sm:$0x1]
    %v1394 = vlaneseq
    %v1395 = vshrl.u32 %v1394, 7
    %v1396 = vsub.s32 0, %v1395
    %v1397 = vrot.slane %v1393, %v1396
    %v1398 = vadd.f32 %v1392, %v1397
    %v1399 = vand.u32 2147483647, %v1398
    %v1400 = vsub.f32 0.0, %v1399
    %v1401 = vmul.f32 %v1400, 1.442695
    %v1402 = vpow.pop %v1401
    %v1403 = vadd.f32 %v1402, 1.0
    %v1404 = vrcp.pop %v1403
    %vm1405 = vcmp.ge.f32.partialorder %v1398, 0.0
    %v1406 = vmul.f32 %v1402, %v1404
    %v1407 = vsel %vm1405, %v1404, %v1406
    %v1408 = vsub.f32 1.0, %v1407
    %v1409 = vlaneseq
    %v1410 = vand.u32 %v1409, 127
    %vm1411 = vcmp.eq.s32.totalorder %v1410, 0
    %1413 = vset.pattern.permute.xlu0 0
    %1414 = vperm.xlu0 %1413, %v1408
    %v1415 = vpop.permute.xlu0 %1414
    %1418 = vset.pattern.permute.xlu0 0
    %1419 = vperm.xlu0 %1418, %v1407
    %v1420 = vpop.permute.xlu0 %1419
    %v1422 = vsel %vm1411, %v1415, %v1420
    %vm1423 = vcmask 15360
    %1424 = vst.msk [vmem:[%s7] sm:$0xff] %vm1423, %v1422
    // Predicated region
    $region54: #{tpu_custom_call.1} parent=1 // pred_check
      _
    $region55: #{tpu_custom_call.1} parent=1 // pred_check_branch
      %1426 = sbr.rel (0) target = $region57
    $region56: #{tpu_custom_call.1} parent=1 // pred_region
      _
    $region57: #{tpu_custom_call.1} parent=1 // pred_fallthru
      _
    // Predicated region
    $region58: #{tpu_custom_call.1} parent=1 // pred_check
      _
    $region59: #{tpu_custom_call.1} parent=1 // pred_check_branch
      %1428 = sbr.rel (0) target = $region61
    $region60: #{tpu_custom_call.1} parent=1 // pred_region
      _
    $region61: #{tpu_custom_call.1} parent=1 // pred_fallthru
      _
    %1429 = vsyncpa [#allocation3], 1
    %1430 = vsyncpa [#allocation5], 1
    %1431 = vsyncpa [#allocation8], 1
    %1432 = vsyncpa [#allocation11], 1

</llo_original>
